<compile_context>
chip_gen: v5e
topology: v5e:2x2
jax: 0.10.0
libtpu: 0.0.40
codegen_flags: <defaults>
</compile_context>

<pallas_src>
import functools

import jax
import jax.numpy as jnp
from jax import lax
from jax.experimental import pallas as pl
from jax.experimental.pallas import tpu as pltpu

_EPS = 1e-5
_MIN_GRID_STEPS = 8       # >= 2x v7x TensorCore count; hides pipeline ramp
_ABS_MAX_ROW_TILE = 32768  # sanity ceiling only; real cap is the byte budget


def _vmem_plan():
    """(pipeline_budget_bytes, scoped_vmem_limit_bytes) per TPU generation."""
    try:
        cap = int(pltpu.get_tpu_info().vmem_capacity_bytes)
    except Exception:
        cap = 64 * 1024 * 1024  # conservative: assume v7x-sized VMEM
    if cap >= 100 * 1024 * 1024:
        # v5e / v6e: 128 MiB physical, strictly HBM-bound -> keep DMAs large.
        return 32 * 1024 * 1024, 64 * 1024 * 1024
    # v7x: 64 MiB physical per TC, 32 MiB default scoped -> leave headroom.
    return 14 * 1024 * 1024, 32 * 1024 * 1024


def _pick_row_tile(dim, itemsize, budget):
    """Largest row tile (multiple of the sublane pack) fitting the byte budget.

    Per-row bytes = dim * (4*itemsize + 8):
      4*itemsize : input + output blocks, each double-buffered, in native dtype
      +8         : widened-f32 temporaries the kernel materializes per element
    """
    sublane = 16 if itemsize == 2 else 8  # bf16/f16 pack 2 rows per sublane
    per_row = dim * (4 * itemsize + 8)
    max_rows = max(1, budget // per_row)
    row_tile = (max_rows // sublane) * sublane
    row_tile = max(sublane, min(row_tile, _ABS_MAX_ROW_TILE))
    return row_tile


def _layernorm_kernel(x_ref, g_ref, b_ref, o_ref):
    # x_ref: (row_tile, dim) block; g_ref/b_ref: (1, dim) broadcast params.
    n_inv = 1.0 / x_ref.shape[-1]

    # Pass 1: fused sum / sum-of-squares reduction (widen per-vreg to f32).
    x = x_ref[...].astype(jnp.float32)
    s = jnp.sum(x, axis=-1, keepdims=True)
    ss = jnp.sum(x * x, axis=-1, keepdims=True)
    mean = s * n_inv
    # E[x^2] - mean^2 can cancel for |mean| >> std; clamp to keep rsqrt sane.
    var = jnp.maximum(ss * n_inv - mean * mean, 0.0)
    inv = lax.rsqrt(var + _EPS)

    # Pass 2: re-read the native-dtype block (no persistent f32 slab),
    # normalize, apply affine, store in the output dtype.
    xc = x_ref[...].astype(jnp.float32) - mean
    if o_ref.dtype == jnp.bfloat16:
        # bf16 epilogue: bf16 VALU packs 2 elem/lane on v6e/v7x; error ~1 ulp.
        xn = (xc * inv).astype(jnp.bfloat16)
        o_ref[...] = (xn * g_ref[...].astype(jnp.bfloat16)
                      + b_ref[...].astype(jnp.bfloat16))
    else:
        o_ref[...] = (xc * inv * g_ref[...].astype(jnp.float32)
                      + b_ref[...].astype(jnp.float32)).astype(o_ref.dtype)


@functools.partial(jax.jit, static_argnames=("row_tile",))
def layer_norm_pallas(x, gamma, beta, *, row_tile=None):
    """LayerNorm over the last axis of x == F.layer_norm(x, (dim,), gamma, beta)."""
    orig_shape = x.shape
    dim = orig_shape[-1]
    x2 = x.reshape(-1, dim)
    rows = x2.shape[0]
    itemsize = jnp.dtype(x.dtype).itemsize
    sublane = 16 if itemsize == 2 else 8

    budget, vmem_limit = _vmem_plan()

    if row_tile is None:
        if rows <= sublane:
            # Single block equal to the full array: always layout-legal.
            row_tile = rows
        else:
            row_tile = _pick_row_tile(dim, itemsize, budget)
            # Keep >= _MIN_GRID_STEPS grid steps (never below one sublane pack)
            # so both v7x TensorCores get work and the pipeline stays full.
            steps_tile = max(
                sublane, (pl.cdiv(rows, _MIN_GRID_STEPS) // sublane) * sublane
            )
            row_tile = min(row_tile, steps_tile)

    grid = (pl.cdiv(rows, row_tile),)  # ragged last block masked by Pallas

    g2 = gamma.reshape(1, dim)
    b2 = beta.reshape(1, dim)

    out = pl.pallas_call(
        _layernorm_kernel,
        out_shape=jax.ShapeDtypeStruct((rows, dim), x.dtype),
        grid_spec=pltpu.PrefetchScalarGridSpec(
            num_scalar_prefetch=0,
            grid=grid,
            in_specs=[
                pl.BlockSpec((row_tile, dim), lambda i: (i, 0)),
                pl.BlockSpec((1, dim), lambda i: (0, 0)),
                pl.BlockSpec((1, dim), lambda i: (0, 0)),
            ],
            out_specs=pl.BlockSpec((row_tile, dim), lambda i: (i, 0)),
        ),
        compiler_params=pltpu.CompilerParams(
            dimension_semantics=("parallel",),
            vmem_limit_bytes=vmem_limit,
        ),
    )(x2, g2, b2)

    return out.reshape(orig_shape)


def layer_norm_reference(x, gamma, beta):
    xf = x.astype(jnp.float32)
    mean = jnp.mean(xf, axis=-1, keepdims=True)
    var = jnp.mean((xf - mean) ** 2, axis=-1, keepdims=True)
    y = (xf - mean) * lax.rsqrt(var + _EPS) * gamma.astype(jnp.float32) \
        + beta.astype(jnp.float32)
    return y.astype(x.dtype)


if __name__ == "__main__":
    key = jax.random.PRNGKey(0)

    # Module-consistent small demo: (batch, seq, dim) with dim=32, f32.
    batch, seq, dim = 2, 8, 32
    x = jax.random.normal(key, (batch, seq, dim), dtype=jnp.float32)

    # Parameters as in __init__: gamma = ones(dim), beta = zeros(dim) buffer.
    gamma = jnp.ones((dim,), dtype=jnp.float32)
    beta = jnp.zeros((dim,), dtype=jnp.float32)

    out = layer_norm_pallas(x, gamma, beta)
    out = jax.block_until_ready(out)
    ref = layer_norm_reference(x, gamma, beta)
    assert out.shape == x.shape
    assert jnp.allclose(out, ref, atol=1e-4, rtol=1e-4), "mismatch vs reference"

    # Exercise the multi-step grid with a ragged last block (rows=15, tile=8).
    x_rag = jax.random.normal(jax.random.PRNGKey(1), (3, 5, dim), dtype=jnp.float32)
    out_rag = jax.block_until_ready(layer_norm_pallas(x_rag, gamma, beta, row_tile=8))
    ref_rag = layer_norm_reference(x_rag, gamma, beta)
    assert jnp.allclose(out_rag, ref_rag, atol=1e-4, rtol=1e-4), "ragged mismatch"

    # Exercise the bf16 epilogue path (lane-dense dim=256, multi-step grid).
    dim_b = 256
    x_bf = jax.random.normal(jax.random.PRNGKey(2), (4, 16, dim_b)).astype(jnp.bfloat16)
    g_bf = (1.0 + 0.1 * jax.random.normal(jax.random.PRNGKey(3), (dim_b,))).astype(jnp.float32)
    b_bf = (0.1 * jax.random.normal(jax.random.PRNGKey(4), (dim_b,))).astype(jnp.float32)
    out_bf = jax.block_until_ready(layer_norm_pallas(x_bf, g_bf, b_bf))
    ref_bf = layer_norm_reference(x_bf, g_bf, b_bf)
    assert jnp.allclose(out_bf.astype(jnp.float32), ref_bf.astype(jnp.float32),
                        atol=3e-2, rtol=3e-2), "bf16 mismatch vs reference"

    print("KERNEL_OK")
</pallas_src>

<mosaic_0001>
module attributes {stable_mosaic.version = 11 : i64} {
  func.func @_layernorm_kernel(%arg0: i32, %arg1: memref<8x32xf32, #tpu.memory_space<vmem>>, %arg2: memref<1x32xf32, #tpu.memory_space<vmem>>, %arg3: memref<1x32xf32, #tpu.memory_space<vmem>>, %arg4: memref<8x32xf32, #tpu.memory_space<vmem>>) attributes {dimension_semantics = [#tpu.dimension_semantics<parallel>], iteration_bounds = array<i64: 2>, scalar_prefetch = 0 : i64, scratch_operands = 0 : i64, tpu.core_type = #tpu.core_type<tc>, window_params = [{transform_indices = @transform_0, window_bounds = array<i64: 8, 32>}, {pipeline_mode = #tpu.pipeline_mode<synchronous>, transform_indices = @transform_1, window_bounds = array<i64: 1, 32>}, {pipeline_mode = #tpu.pipeline_mode<synchronous>, transform_indices = @transform_2, window_bounds = array<i64: 1, 32>}, {transform_indices = @transform_3, window_bounds = array<i64: 8, 32>}]} {
    %c0 = arith.constant 0 : index
    %c0_0 = arith.constant 0 : index
    %0 = vector.load %arg1[%c0, %c0_0] : memref<8x32xf32, #tpu.memory_space<vmem>>, vector<8x32xf32>
    %cst = arith.constant dense<0.000000e+00> : vector<8xf32>
    %1 = vector.multi_reduction <add>, %0, %cst [1] : vector<8x32xf32> to vector<8xf32>
    %2 = vector.shape_cast %1 : vector<8xf32> to vector<8x1xf32>
    %3 = arith.mulf %0, %0 : vector<8x32xf32>
    %cst_1 = arith.constant dense<0.000000e+00> : vector<8xf32>
    %4 = vector.multi_reduction <add>, %3, %cst_1 [1] : vector<8x32xf32> to vector<8xf32>
    %5 = vector.shape_cast %4 : vector<8xf32> to vector<8x1xf32>
    %cst_2 = arith.constant 3.125000e-02 : f32
    %6 = vector.broadcast %cst_2 : f32 to vector<8x1xf32>
    %7 = arith.mulf %2, %6 : vector<8x1xf32>
    %cst_3 = arith.constant 3.125000e-02 : f32
    %8 = vector.broadcast %cst_3 : f32 to vector<8x1xf32>
    %9 = arith.mulf %5, %8 : vector<8x1xf32>
    %10 = arith.mulf %7, %7 : vector<8x1xf32>
    %11 = arith.subf %9, %10 : vector<8x1xf32>
    %cst_4 = arith.constant 0.000000e+00 : f32
    %12 = vector.broadcast %cst_4 : f32 to vector<8x1xf32>
    %13 = arith.maximumf %11, %12 : vector<8x1xf32>
    %cst_5 = arith.constant 9.99999974E-6 : f32
    %14 = vector.broadcast %cst_5 : f32 to vector<8x1xf32>
    %15 = arith.addf %13, %14 : vector<8x1xf32>
    %16 = math.rsqrt %15 : vector<8x1xf32>
    %c0_6 = arith.constant 0 : index
    %c0_7 = arith.constant 0 : index
    %17 = vector.load %arg1[%c0_6, %c0_7] : memref<8x32xf32, #tpu.memory_space<vmem>>, vector<8x32xf32>
    %18 = vector.broadcast %7 : vector<8x1xf32> to vector<8x32xf32>
    %19 = arith.subf %17, %18 : vector<8x32xf32>
    %20 = vector.broadcast %16 : vector<8x1xf32> to vector<8x32xf32>
    %21 = arith.mulf %19, %20 : vector<8x32xf32>
    %c0_8 = arith.constant 0 : index
    %c0_9 = arith.constant 0 : index
    %22 = vector.load %arg2[%c0_8, %c0_9] : memref<1x32xf32, #tpu.memory_space<vmem>>, vector<1x32xf32>
    %23 = vector.broadcast %22 : vector<1x32xf32> to vector<8x32xf32>
    %24 = arith.mulf %21, %23 : vector<8x32xf32>
    %c0_10 = arith.constant 0 : index
    %c0_11 = arith.constant 0 : index
    %25 = vector.load %arg3[%c0_10, %c0_11] : memref<1x32xf32, #tpu.memory_space<vmem>>, vector<1x32xf32>
    %26 = vector.broadcast %25 : vector<1x32xf32> to vector<8x32xf32>
    %27 = arith.addf %24, %26 : vector<8x32xf32>
    %c0_12 = arith.constant 0 : index
    %c0_13 = arith.constant 0 : index
    %28 = vector.load %arg4[%c0_12, %c0_13] : memref<8x32xf32, #tpu.memory_space<vmem>>, vector<8x32xf32>
    tpu.vector_store %arg4[%c0_12, %c0_13], %27 {strides = array<i32>} : memref<8x32xf32, #tpu.memory_space<vmem>>, vector<8x32xf32>,
    return
  }
  func.func @transform_0(%arg0: i32) -> (i32, i32) {
    %c0_i32 = arith.constant 0 : i32
    %c0_i32_0 = arith.constant 0 : i32
    return %arg0, %c0_i32 : i32, i32
  }
  func.func @transform_1(%arg0: i32) -> (i32, i32) {
    %c0_i32 = arith.constant 0 : i32
    %c0_i32_0 = arith.constant 0 : i32
    %c0_i32_1 = arith.constant 0 : i32
    return %c0_i32, %c0_i32_0 : i32, i32
  }
  func.func @transform_2(%arg0: i32) -> (i32, i32) {
    %c0_i32 = arith.constant 0 : i32
    %c0_i32_0 = arith.constant 0 : i32
    %c0_i32_1 = arith.constant 0 : i32
    return %c0_i32, %c0_i32_0 : i32, i32
  }
  func.func @transform_3(%arg0: i32) -> (i32, i32) {
    %c0_i32 = arith.constant 0 : i32
    %c0_i32_0 = arith.constant 0 : i32
    return %arg0, %c0_i32 : i32, i32
  }
}

</mosaic_0001>

<llo_original>
// kernel: layer_norm_pallas.1
$region0: #{layer_norm_pallas.1}
  #allocation0 [shape = 'u32[]', space=smem, size = 0x4, offset = 0x4, fixed_abs, tag = 'smem constant byte address 0x4 - core index']
  #allocation1 [shape = 'u32[72,128]{1,0:T(1,128)}', space=vmem, size = 0x9000, scoped, tag = 'internal scratch']
  %s0 = inlined_call_operand.hbm [shape: f32[16,32], index: 0, kind: input, shape index: {}]
  %s1 = inlined_call_operand.vmem [shape: f32[1,32], index: 1, kind: input, shape index: {}]
  %s2 = inlined_call_operand.vmem [shape: f32[1,32], index: 2, kind: input, shape index: {}]
  %s3 = inlined_call_operand.hbm [shape: f32[16,32], index: 3, kind: output, shape index: {}]
  %s4 = sld [smem:[#allocation0]]
  $region49: #{layer_norm_pallas.1} parent=0
    _
  %s6 = ssub.s32 1, %s4
  %s7 = scalar_select 0, %s6, %s4
  $region1: #{layer_norm_pallas.1} parent=0
    #allocation2 [shape = 'u8[8192]{0}', space=vmem, size = 0x2000, scoped, tag = 'input window, operand 0']
    #allocation3 [shape = 's32[2]{0}', space=sflag, size = 0x8, scoped, tag = 'scoped memory for layer_norm_pallas.1']
    #allocation4 [shape = 's32[2]{0}', space=sflag, size = 0x8, scoped, tag = 'scoped memory for layer_norm_pallas.1']
    #allocation5 [shape = 'u8[8192]{0}', space=vmem, size = 0x2000, scoped, tag = 'output window, operand 0']
    %8 = vsyncpa [#allocation3], 0
    %s9 = scalar_lea.sflag [#allocation3], 1
    %10 = vsyncpa %s9, 0
    %11 = vsyncpa [#allocation4], 0
    %s12 = scalar_lea.sflag [#allocation4], 1
    %13 = vsyncpa %s12, 0
    loop: start=0, step=1, limit=4
    $region2: #{layer_norm_pallas.1} parent=1 // loop_pre_header
      _
    $region3: #{layer_norm_pallas.1} parent=1 // loop_header
      %s15 = sphi 0, %s19
      %p16 = scmp.ge.s32.totalorder %s15, 4
      %s25 = sphi 0, %s27
      %s28 = sphi 0, %s25
      %s29 = sphi 0, %s28
      %s45 = sphi 0, %s29
      %s49 = sphi 0, %s49
      %s51 = sphi 0, %s49
      %s52 = sphi 0, %s51
      %s66 = sphi 0, %s52
      %s70 = sphi 0, %s70
      %s72 = sphi 0, %s70
      %s73 = sphi 0, %s72
      %s87 = sphi 0, %s73
      %s93 = sphi 0, %s95
      %s96 = sphi 0, %s93
      %s97 = sphi 0, %s96
      %s113 = sphi 0, %s97
    $region4: #{layer_norm_pallas.1} parent=1 // loop_header_branch
      %18 = sbr.rel (%p16) target = $region8
    $region5: #{layer_norm_pallas.1} parent=1 // loop_body
      %s20 = ssub.s32 %s15, 1
      %s21 = ssub.s32 %s15, 2
      %s22 = sadd.s32 %s15, 1
      %s23 = ssub.s32 %s15, %s22
      %p24 = scmp.eq.s32.totalorder %s23, 0
      %s26 = sadd.s32 %s25, 1
      %s27 = scalar_select %p24, %s25, %s26
      %p30 = pneg %p24
      %p31 = scmp.eq.s32.totalorder %s15, 1
      %p32 = por %p30, %p31
      %p33 = scmp.ne.s32.totalorder %s25, %s28
      %p34 = scmp.eq.s32.totalorder %s15, 0
      %p35 = por %p33, %p34
      %p36 = scmp.ne.s32.totalorder %s25, %s28
      %p37 = scmp.eq.s32.totalorder %s20, 1
      %p38 = por %p36, %p37
      %p39 = scmp.ne.s32.totalorder %s28, %s29
      %p40 = scmp.eq.s32.totalorder %s20, 0
      %p41 = por %p39, %p40
      %p42 = scmp.ne.s32.totalorder %s28, %s29
      %p43 = scmp.eq.s32.totalorder %s21, 1
      %p44 = por %p42, %p43
      %p46 = scmp.ne.s32.totalorder %s29, %s45
      %p47 = scmp.eq.s32.totalorder %s21, 0
      %p48 = por %p46, %p47
      %s50 = sadd.s32 %s49, 1
      %p53 = scmp.eq.s32.totalorder %s15, 1
      %p54 = scmp.ne.s32.totalorder %s49, %s51
      %p55 = scmp.eq.s32.totalorder %s15, 0
      %p56 = por %p54, %p55
      %p57 = scmp.ne.s32.totalorder %s49, %s51
      %p58 = scmp.eq.s32.totalorder %s20, 1
      %p59 = por %p57, %p58
      %p60 = scmp.ne.s32.totalorder %s51, %s52
      %p61 = scmp.eq.s32.totalorder %s20, 0
      %p62 = por %p60, %p61
      %p63 = scmp.ne.s32.totalorder %s51, %s52
      %p64 = scmp.eq.s32.totalorder %s21, 1
      %p65 = por %p63, %p64
      %p67 = scmp.ne.s32.totalorder %s52, %s66
      %p68 = scmp.eq.s32.totalorder %s21, 0
      %p69 = por %p67, %p68
      %s71 = sadd.s32 %s70, 1
      %p74 = scmp.eq.s32.totalorder %s15, 1
      %p75 = scmp.ne.s32.totalorder %s70, %s72
      %p76 = scmp.eq.s32.totalorder %s15, 0
      %p77 = por %p75, %p76
      %p78 = scmp.ne.s32.totalorder %s70, %s72
      %p79 = scmp.eq.s32.totalorder %s20, 1
      %p80 = por %p78, %p79
      %p81 = scmp.ne.s32.totalorder %s72, %s73
      %p82 = scmp.eq.s32.totalorder %s20, 0
      %p83 = por %p81, %p82
      %p84 = scmp.ne.s32.totalorder %s72, %s73
      %p85 = scmp.eq.s32.totalorder %s21, 1
      %p86 = por %p84, %p85
      %p88 = scmp.ne.s32.totalorder %s73, %s87
      %p89 = scmp.eq.s32.totalorder %s21, 0
      %p90 = por %p88, %p89
      %s91 = ssub.s32 %s15, %s22
      %p92 = scmp.eq.s32.totalorder %s91, 0
      %s94 = sadd.s32 %s93, 1
      %s95 = scalar_select %p92, %s93, %s94
      %p98 = pneg %p92
      %p99 = scmp.eq.s32.totalorder %s15, 1
      %p100 = por %p98, %p99
      %p101 = scmp.ne.s32.totalorder %s93, %s96
      %p102 = scmp.eq.s32.totalorder %s15, 0
      %p103 = por %p101, %p102
      %p104 = scmp.ne.s32.totalorder %s93, %s96
      %p105 = scmp.eq.s32.totalorder %s20, 1
      %p106 = por %p104, %p105
      %p107 = scmp.ne.s32.totalorder %s96, %s97
      %p108 = scmp.eq.s32.totalorder %s20, 0
      %p109 = por %p107, %p108
      %p110 = scmp.ne.s32.totalorder %s96, %s97
      %p111 = scmp.eq.s32.totalorder %s21, 1
      %p112 = por %p110, %p111
      %p114 = scmp.ne.s32.totalorder %s97, %s113
      %p115 = scmp.eq.s32.totalorder %s21, 0
      %p116 = por %p114, %p115
      %p117 = scmp.le.s32.totalorder 1, %s15
      %p118 = scmp.lt.s32.totalorder %s15, 3
      %p119 = pnand %p117, %p118
      %p120 = pneg %p119
      // Predicated region
      $region9: #{layer_norm_pallas.1} parent=5 // pred_check
        _
      $region10: #{layer_norm_pallas.1} parent=5 // pred_check_branch
        %122 = sbr.rel (%p119) target = $region12
      $region11: #{layer_norm_pallas.1} parent=5 // pred_region
        %s123 = ssub.s32 %s15, 1
        // Predicated region
        $region13: #{layer_norm_pallas.1} parent=11 // pred_check
          %p124 = pneg %p62
        $region14: #{layer_norm_pallas.1} parent=11 // pred_check_branch
          %126 = sbr.rel (%p124) target = $region16
        $region15: #{layer_norm_pallas.1} parent=11 // pred_region
          _
        $region16: #{layer_norm_pallas.1} parent=11 // pred_fallthru
          _
        // Predicated region
        $region17: #{layer_norm_pallas.1} parent=11 // pred_check
          %p127 = pneg %p83
        $region18: #{layer_norm_pallas.1} parent=11 // pred_check_branch
          %129 = sbr.rel (%p127) target = $region20
        $region19: #{layer_norm_pallas.1} parent=11 // pred_region
          _
        $region20: #{layer_norm_pallas.1} parent=11 // pred_fallthru
          _
      $region12: #{layer_norm_pallas.1} parent=5 // pred_fallthru
        _
      %p130 = scmp.lt.s32.totalorder %s15, 2
      // Predicated region
      $region21: #{layer_norm_pallas.1} parent=5 // pred_check
        %p131 = pneg %p130
      $region22: #{layer_norm_pallas.1} parent=5 // pred_check_branch
        %133 = sbr.rel (%p131) target = $region24
      $region23: #{layer_norm_pallas.1} parent=5 // pred_region
        // Predicated region
        $region25: #{layer_norm_pallas.1} parent=23 // pred_check
          %p134 = pneg %p35
        $region26: #{layer_norm_pallas.1} parent=23 // pred_check_branch
          %136 = sbr.rel (%p134) target = $region28
        $region27: #{layer_norm_pallas.1} parent=23 // pred_region
          %s137 = sand.u32 %s25, 1
          %s138 = scalar_lea.sflag [#allocation3], %s137
          %s139 = sand.u32 %s25, 1
          %s140 = smul.addr %s139, 8
          %s141 = scalar_lea.vmem [#allocation2], %s140
          %143 = vsyncadd %s138, 0
          %s144 = smul.addr %s15, 8
          %s145 = scalar_lea.hbm %s0, %s144
          %s147 = sshll.u32 %s145, 4
          %s148 = int_to_ptr.hbm [resolvable:$true] %s147
          %s149 = sshll.u32 %s141, 4
          %s150 = int_to_ptr.vmem [resolvable:$true] %s149
          %152 = dma.hbm_to_vmem [thread:$0]  %s148, 128, %s150, %s138
        $region28: #{layer_norm_pallas.1} parent=23 // pred_fallthru
          _
      $region24: #{layer_norm_pallas.1} parent=5 // pred_fallthru
        _
      %p153 = scmp.le.s32.totalorder 1, %s15
      %p154 = scmp.lt.s32.totalorder %s15, 3
      %p155 = pnand %p153, %p154
      %p156 = pneg %p155
      // Predicated region
      $region29: #{layer_norm_pallas.1} parent=5 // pred_check
        _
      $region30: #{layer_norm_pallas.1} parent=5 // pred_check_branch
        %158 = sbr.rel (%p155) target = $region32
      $region31: #{layer_norm_pallas.1} parent=5 // pred_region
        %s159 = ssub.s32 %s15, 1
        %s160 = sand.u32 %s28, 1
        %s161 = scalar_lea.sflag [#allocation3], %s160
        %s162 = sand.u32 %s28, 1
        %s163 = smul.addr %s162, 8
        %s164 = scalar_lea.vmem [#allocation2], %s163
        // Predicated region
        $region33: #{layer_norm_pallas.1} parent=31 // pred_check
          %p165 = pneg %p41
        $region34: #{layer_norm_pallas.1} parent=31 // pred_check_branch
          %167 = sbr.rel (%p165) target = $region36
        $region35: #{layer_norm_pallas.1} parent=31 // pred_region
          %169 = dma.done %s161, 128
        $region36: #{layer_norm_pallas.1} parent=31 // pred_fallthru
          _
        %s170 = sand.u32 %s28, 1
        %s171 = scalar_lea.sflag [#allocation3], %s170
        %s172 = sand.u32 %s28, 1
        %s173 = smul.addr %s172, 8
        %s174 = scalar_lea.vmem [#allocation2], %s173
        %p175 = pneg %p41
        %p176 = pneg %p38
        %p177 = pneg %p62
        %p178 = pneg %p59
        %p179 = pneg %p83
        %p180 = pneg %p80
        %p181 = pneg %p109
        %p182 = pneg %p106
        %s183 = sand.u32 %s96, 1
        %s184 = scalar_lea.sflag [#allocation4], %s183
        %s185 = sand.u32 %s96, 1
        %s186 = smul.addr %s185, 8
        %s187 = scalar_lea.vmem [#allocation5], %s186
        %v188 = vld [vmem:[%s164] sm:$0xff]
        %vm189 = vcmask 261120
        %v190 = vsel %vm189, %v188, 0.0
        %191 = vadd.xlane.f32.xlu0 %v190
        %v192 = vpop.xlane.xlu0 %191
        %v193 = vmul.f32 %v188, %v188
        %v194 = vsel %vm189, %v193, 0.0
        %195 = vadd.xlane.f32.xlu0 %v194
        %v196 = vpop.xlane.xlu0 %195
        %v197 = vmul.f32 %v192, 0.03125
        %v198 = vmul.f32 %v196, 0.03125
        %v199 = vmul.f32 %v197, %v197
        %v200 = vsub.f32 %v198, %v199
        %v201 = vmax.f32 %v200, 0.0
        %v202 = vadd.f32 %v201, 1e-05
        %v203 = vrsqrt.pop %v202
        %v204 = vmul.f32 %v203, %v202
        %v205 = vmul.f32 %v204, %v203
        %v206 = vmul.f32 0.5, %v205
        %v207 = vsub.f32 1.5, %v206
        %v208 = vmul.f32 %v203, %v207
        %vm209 = vweird.f32 %v202
        %vm210 = vweird.f32 %v203
        %vm211 = vmor %vm209, %vm210
        %v212 = vsel %vm211, %v203, %v208
        %v213 = vsub.f32 %v188, %v197
        %v214 = vmul.f32 %v213, %v212
        %v215 = vld [vmem:[%s1] sm:$0x1]
        %v217 = vperm.slane %v215, 0
        %v219 = vmul.f32 %v214, %v217
        %v220 = vld [vmem:[%s2] sm:$0x1]
        %v222 = vperm.slane %v220, 0
        %v224 = vadd.f32 %v219, %v222
        %225 = vst.msk [vmem:[%s187] sm:$0xff] %vm189, %v224
        %s226 = sand.u32 %s96, 1
        %s227 = scalar_lea.sflag [#allocation4], %s226
        %s228 = sand.u32 %s96, 1
        %s229 = smul.addr %s228, 8
        %s230 = scalar_lea.vmem [#allocation5], %s229
        // Predicated region
        $region37: #{layer_norm_pallas.1} parent=31 // pred_check
          %p231 = pneg %p106
        $region38: #{layer_norm_pallas.1} parent=31 // pred_check_branch
          %233 = sbr.rel (%p231) target = $region40
        $region39: #{layer_norm_pallas.1} parent=31 // pred_region
          %235 = vsyncadd %s227, 0
          %s236 = smul.addr %s20, 8
          %s237 = scalar_lea.hbm %s3, %s236
          %s239 = sshll.u32 %s230, 4
          %s240 = int_to_ptr.vmem [resolvable:$true] %s239
          %s241 = sshll.u32 %s237, 4
          %s242 = int_to_ptr.hbm [resolvable:$true] %s241
          %244 = dma.vmem_to_hbm [thread:$0]  %s240, 128, %s242, %s227
        $region40: #{layer_norm_pallas.1} parent=31 // pred_fallthru
          _
      $region32: #{layer_norm_pallas.1} parent=5 // pred_fallthru
        _
      %p245 = scmp.le.s32.totalorder 2, %s15
      // Predicated region
      $region41: #{layer_norm_pallas.1} parent=5 // pred_check
        %p246 = pneg %p245
      $region42: #{layer_norm_pallas.1} parent=5 // pred_check_branch
        %248 = sbr.rel (%p246) target = $region44
      $region43: #{layer_norm_pallas.1} parent=5 // pred_region
        %s249 = ssub.s32 %s15, 2
        // Predicated region
        $region45: #{layer_norm_pallas.1} parent=43 // pred_check
          %p250 = pneg %p112
        $region46: #{layer_norm_pallas.1} parent=43 // pred_check_branch
          %252 = sbr.rel (%p250) target = $region48
        $region47: #{layer_norm_pallas.1} parent=43 // pred_region
          %s253 = sand.u32 %s97, 1
          %s254 = scalar_lea.sflag [#allocation4], %s253
          %s255 = sand.u32 %s97, 1
          %s256 = smul.addr %s255, 8
          %s257 = scalar_lea.vmem [#allocation5], %s256
          %259 = dma.done %s254, 128
        $region48: #{layer_norm_pallas.1} parent=43 // pred_fallthru
          _
      $region44: #{layer_norm_pallas.1} parent=5 // pred_fallthru
        _
    $region6: #{layer_norm_pallas.1} parent=1 // loop_footer
      %s19 = sadd.s32 1, %s15
    $region7: #{layer_norm_pallas.1} parent=1 // loop_footer_branch
      %14 = sbr.rel target = $region3
    $region8: #{layer_norm_pallas.1} parent=1 // loop_exit
      _
    %260 = vsyncpa [#allocation3], 1
    %s261 = scalar_lea.sflag [#allocation3], 1
    %262 = vsyncpa %s261, 1
    %263 = vsyncpa [#allocation4], 1
    %s264 = scalar_lea.sflag [#allocation4], 1
    %265 = vsyncpa %s264, 1

</llo_original>
